<compile_context>
chip_gen: v5e
topology: v5e:2x2
jax: 0.10.0
libtpu: 0.0.40
codegen_flags: <defaults>
</compile_context>

<pallas_src>
import functools
import math

import jax
import jax.numpy as jnp
import numpy as np
from jax.experimental import pallas as pl
from jax.experimental.pallas import tpu as pltpu

LANE = 128
SUBLANE_F32 = 8
SUBLANE_BF16 = 16
_MAX_TILE_ROWS = 4096
_MIN_GRID_STEPS = 4          # >= 2 blocks per TensorCore on dual-TC v7x; ~free elsewhere
_FALLBACK_BYTES = 256 * 1024 # below this, a plain fused XLA add is strictly faster


def _round_up(n: int, m: int) -> int:
    return ((n + m - 1) // m) * m


@functools.lru_cache(maxsize=None)
def _target_block_bytes() -> int:
    """Per-generation x-block size target (f32-equivalent, lane-padded bytes).

    v5e (~0.82 TB/s): 1 MiB blocks already hide the ~0.35 us/step pipeline overhead.
    v6e (~1.4 TB/s):  2 MiB.
    v7x (~3.2 TB/s, only 64 MiB physical VMEM): 3 MiB, sized so ~6 live tile buffers
    stay well inside the explicit scoped-VMEM limit we set below.
    """
    try:
        kind = jax.devices()[0].device_kind.lower()
    except Exception:
        return 1 << 20
    if "v7" in kind:
        return 3 << 20
    if "v6" in kind:
        return 2 << 20
    return 1 << 20


def _choose_row_tile(n_rows: int, width: int, sub: int) -> int:
    """Row tile (multiple of `sub`, or the full array) sized for ~6 live tile buffers
    (x in x2, out x2, cos x1, sin x1) at the per-generation block-byte target,
    counting the lane-padded width, while keeping >= _MIN_GRID_STEPS grid steps."""
    eff_width = _round_up(width, LANE)          # (rows, 48) occupies (rows, 128) in VMEM
    rows = _target_block_bytes() // (eff_width * 4)   # budget in f32-equivalent bytes
    rows = max(sub, min(rows, _MAX_TILE_ROWS))
    if n_rows >= _MIN_GRID_STEPS * sub:
        # Keep >= 4 grid steps: input-prefetch/output-writeback overlap on every chip
        # and 2 blocks per core once the "parallel" axis is sharded across v7x's 2 TCs.
        rows = min(rows, _round_up(pl.cdiv(n_rows, _MIN_GRID_STEPS), sub))
    rows = max(sub, (rows // sub) * sub)
    if rows >= n_rows:
        return n_rows                           # single full-array block (always legal)
    return rows


def _build_pe_tables(d_model: int, feat: int, width: int, tile_rows: int, grid: int):
    """pe[l, j]/10 for the element at (block i, row r, col c) of the tiled
    (n_rows, width) layout equals
        A[i, 0, c] * COS[r, c] + B[i, 0, c] * SIN[r, c]
    with l = l0(i) + (r*width + c)//feat and j = c % feat (angle-addition identity).
    Built host-side in float64 (numpy) and rounded once to f32, so the reconstruction
    does not drift versus the direct sin/cos even at large max_len."""
    j = np.arange(width, dtype=np.int64) % feat                              # (W,)
    div_term = np.exp(np.arange(0, d_model, 2, dtype=np.float64)
                      * (-(math.log(10000.0) / d_model)))                    # (d_model//2,)
    w = div_term[j // 2]                                                     # (W,)
    even = (j % 2) == 0

    rc = (np.arange(tile_rows, dtype=np.int64)[:, None] * width
          + np.arange(width, dtype=np.int64)[None, :])                       # (tile, W)
    delta = (rc // feat).astype(np.float64)
    cos_tab = np.cos(delta * w).astype(np.float32)                           # (tile, W)
    sin_tab = np.sin(delta * w).astype(np.float32)

    # per-block carrier at the block's first sequence position (parity + /10 folded in)
    l0 = (np.arange(grid, dtype=np.int64) * ((tile_rows * width) // feat)).astype(np.float64)
    ang0 = l0[:, None] * w[None, :]                                          # (grid, W)
    s0, c0 = np.sin(ang0), np.cos(ang0)
    a = (np.where(even, s0, c0) * 0.1).astype(np.float32).reshape(grid, 1, width)
    b = (np.where(even, c0, -s0) * 0.1).astype(np.float32).reshape(grid, 1, width)
    return jnp.asarray(a), jnp.asarray(b), jnp.asarray(cos_tab), jnp.asarray(sin_tab)


def _pe_add_kernel(x_ref, a_ref, b_ref, cos_ref, sin_ref, o_ref):
    # Pure VPU hot path with exactly 3 per-element load streams (x, cos, sin).
    # A/B/COS/SIN are VMEM-resident (constant index_map, single-buffered); A/B rows
    # are picked per grid step with program_id — no per-step DMA for them.
    i = pl.program_id(0)
    a = a_ref[i]                                   # (1, W) f32
    b = b_ref[i]                                   # (1, W) f32
    pe = a * cos_ref[...] + b * sin_ref[...]       # (tile, W) f32
    o_ref[...] = (x_ref[...].astype(jnp.float32) + pe).astype(o_ref.dtype)


def positional_encoding_reference(x, d_model, max_len):
    """Direct transcription of the torch module (eval-mode dropout == identity)."""
    L, F = x.shape
    pos = jnp.arange(max_len, dtype=jnp.float32)[:, None]
    div_term = jnp.exp(jnp.arange(0, d_model, 2, dtype=jnp.float32)
                       * jnp.float32(-(math.log(10000.0) / d_model)))
    ang = pos * div_term
    pe = jnp.zeros((max_len, d_model), jnp.float32)
    pe = pe.at[:, 0::2].set(jnp.sin(ang))
    pe = pe.at[:, 1::2].set(jnp.cos(ang))
    pe = pe / 10.0
    return (x.astype(jnp.float32) + pe[:L, :F]).astype(x.dtype)


@functools.partial(jax.jit,
                   static_argnames=("d_model", "max_len", "donate_x", "allow_jax_fallback"))
def positional_encoding_forward(x, *, d_model, max_len,
                                donate_x=False, allow_jax_fallback=True):
    """out = dropout_eval(x + pe[:, :x.shape[1]]) with x of shape (max_len, feat)."""
    L, F = x.shape
    assert d_model % 2 == 0, "d_model must be even (same latent constraint as the torch module)"
    assert L == max_len and F <= d_model, "torch broadcast rule: x is (max_len, feat<=d_model)"

    if x.dtype == jnp.float32:
        sub = SUBLANE_F32
    elif x.dtype == jnp.bfloat16:
        sub = SUBLANE_BF16
    else:
        raise NotImplementedError("float32 / bfloat16 inputs only")
    itemsize = int(x.dtype.itemsize)

    if allow_jax_fallback and L * F * itemsize <= _FALLBACK_BYTES:
        # Small inputs: pallas_call launch + table constants + >=1 pipeline step dominate;
        # a fused XLA add (ideally folded into the consumer) is strictly faster.
        return positional_encoding_reference(x, d_model, max_len)

    # Layout: flatten to a lane-dense (-1, 128) slab when that is a free row-major
    # bitcast; otherwise keep (L, F) with full-width blocks (contiguous HBM DMA,
    # masked stores accepted — they stay hidden under the DMA on this mem-bound op).
    if (F % LANE != 0) and (LANE % F == 0) and ((L * F) % LANE == 0):
        x2 = x.reshape(-1, LANE)
        width = LANE
    else:
        x2 = x
        width = F
    n_rows = x2.shape[0]

    tile_rows = _choose_row_tile(n_rows, width, sub)
    grid = pl.cdiv(n_rows, tile_rows)
    a_tab, b_tab, cos_tab, sin_tab = _build_pe_tables(d_model, F, width, tile_rows, grid)

    # Explicit scoped-VMEM limit computed from the actual (lane/sublane-padded) buffer
    # set, assuming worst-case double buffering everywhere, plus headroom.  With the
    # per-generation block targets this stays <= ~28 MiB (safe even on v7x's 64 MiB).
    eff_w = _round_up(width, LANE)
    eff_rows = _round_up(tile_rows, sub)
    x_blk = eff_rows * eff_w * itemsize
    tab_blk = eff_rows * eff_w * 4
    ab_bytes = 2 * grid * 8 * eff_w * 4
    vmem_limit = int(max(4 * x_blk + 4 * tab_blk + 2 * ab_bytes + (2 << 20), 16 << 20))

    cost = pl.CostEstimate(
        flops=4 * n_rows * width,
        transcendentals=0,
        bytes_accessed=(2 * n_rows * width * itemsize      # x in + out out
                        + 2 * tile_rows * width * 4        # cos/sin tables (fetched once)
                        + 2 * grid * width * 4))           # A/B carriers

    resident = dict(pipeline_mode=pl.Buffered(1))          # constant blocks: 1 buffer, 1 fetch

    out2 = pl.pallas_call(
        _pe_add_kernel,
        out_shape=jax.ShapeDtypeStruct((n_rows, width), x.dtype),
        grid=(grid,),
        in_specs=[
            pl.BlockSpec((tile_rows, width), lambda i: (i, 0)),                    # x: streamed
            pl.BlockSpec((grid, 1, width), lambda i: (0, 0, 0), **resident),       # A: resident
            pl.BlockSpec((grid, 1, width), lambda i: (0, 0, 0), **resident),       # B: resident
            pl.BlockSpec((tile_rows, width), lambda i: (0, 0), **resident),        # COS: resident
            pl.BlockSpec((tile_rows, width), lambda i: (0, 0), **resident),        # SIN: resident
        ],
        out_specs=pl.BlockSpec((tile_rows, width), lambda i: (i, 0)),
        compiler_params=pltpu.CompilerParams(dimension_semantics=("parallel",),
                                             vmem_limit_bytes=vmem_limit),
        cost_estimate=cost,
        input_output_aliases=({0: 0} if donate_x else {}),
    )(x2, a_tab, b_tab, cos_tab, sin_tab)

    return out2.reshape(L, F)


if __name__ == "__main__":
    key = jax.random.PRNGKey(0)
    # (max_len, d_model, feat, dtype, allow_jax_fallback)
    cases = [
        (16,   32,  32,  jnp.float32,  False),  # flat lane-dense path, single full block
        (256,  64,  64,  jnp.float32,  False),  # flat lane-dense path, 4-step grid
        (64,   48,  48,  jnp.float32,  False),  # width not 128-friendly: full-width blocks
        (32,   64,  32,  jnp.float32,  False),  # feat < d_model: exercises the pe[:, :feat] slice
        (256,  64,  64,  jnp.bfloat16, False),  # bf16 I/O path (f32 math in-kernel)
        (2048, 128, 128, jnp.float32,  True),   # above fallback threshold -> Pallas path
        (16,   32,  32,  jnp.float32,  True),   # tiny input -> pure-JAX fallback path
    ]
    for max_len, d_model, feat, dtype, fb in cases:
        key, subkey = jax.random.split(key)
        x = jax.random.normal(subkey, (max_len, feat), dtype=jnp.float32).astype(dtype)
        out = positional_encoding_forward(x, d_model=d_model, max_len=max_len,
                                          allow_jax_fallback=fb)
        out = jax.block_until_ready(out)
        assert out.shape == x.shape and out.dtype == x.dtype
        ref = positional_encoding_reference(x.astype(jnp.float32), d_model, max_len)
        err = float(jnp.max(jnp.abs(out.astype(jnp.float32) - ref)))
        if dtype == jnp.bfloat16:
            tol = 5e-2                 # bf16 output rounding
        elif max_len > 512:
            tol = 2e-4                 # jnp-f32 reference's own sin/cos error at large args
        else:
            tol = 1e-5
        assert err <= tol, (max_len, d_model, feat, str(dtype), err, tol)
    print("KERNEL_OK")
</pallas_src>

<mosaic_0001>
module attributes {stable_mosaic.version = 11 : i64} {
  func.func @_pe_add_kernel(%arg0: i32, %arg1: memref<4x128xf32, #tpu.memory_space<vmem>>, %arg2: memref<1x1x128xf32, #tpu.memory_space<vmem>>, %arg3: memref<1x1x128xf32, #tpu.memory_space<vmem>>, %arg4: memref<4x128xf32, #tpu.memory_space<vmem>>, %arg5: memref<4x128xf32, #tpu.memory_space<vmem>>, %arg6: memref<4x128xf32, #tpu.memory_space<vmem>>) attributes {dimension_semantics = [#tpu.dimension_semantics<parallel>], iteration_bounds = array<i64: 1>, scalar_prefetch = 0 : i64, scratch_operands = 0 : i64, tpu.core_type = #tpu.core_type<tc>, window_params = [{transform_indices = @transform_0, window_bounds = array<i64: 4, 128>}, {pipeline_mode = #tpu.pipeline_mode<synchronous>, transform_indices = @transform_1, window_bounds = array<i64: 1, 1, 128>}, {pipeline_mode = #tpu.pipeline_mode<synchronous>, transform_indices = @transform_2, window_bounds = array<i64: 1, 1, 128>}, {pipeline_mode = #tpu.pipeline_mode<synchronous>, transform_indices = @transform_3, window_bounds = array<i64: 4, 128>}, {pipeline_mode = #tpu.pipeline_mode<synchronous>, transform_indices = @transform_4, window_bounds = array<i64: 4, 128>}, {transform_indices = @transform_5, window_bounds = array<i64: 4, 128>}]} {
    %0 = arith.index_cast %arg0 : i32 to index
    %c0 = arith.constant 0 : index
    %c0_0 = arith.constant 0 : index
    %1 = vector.load %arg2[%0, %c0, %c0_0] : memref<1x1x128xf32, #tpu.memory_space<vmem>>, vector<1x1x128xf32>
    %2 = vector.shape_cast %1 : vector<1x1x128xf32> to vector<1x128xf32>
    %3 = arith.index_cast %arg0 : i32 to index
    %c0_1 = arith.constant 0 : index
    %c0_2 = arith.constant 0 : index
    %4 = vector.load %arg3[%3, %c0_1, %c0_2] : memref<1x1x128xf32, #tpu.memory_space<vmem>>, vector<1x1x128xf32>
    %5 = vector.shape_cast %4 : vector<1x1x128xf32> to vector<1x128xf32>
    %c0_3 = arith.constant 0 : index
    %c0_4 = arith.constant 0 : index
    %6 = vector.load %arg4[%c0_3, %c0_4] : memref<4x128xf32, #tpu.memory_space<vmem>>, vector<4x128xf32>
    %7 = vector.broadcast %2 : vector<1x128xf32> to vector<4x128xf32>
    %8 = arith.mulf %7, %6 : vector<4x128xf32>
    %c0_5 = arith.constant 0 : index
    %c0_6 = arith.constant 0 : index
    %9 = vector.load %arg5[%c0_5, %c0_6] : memref<4x128xf32, #tpu.memory_space<vmem>>, vector<4x128xf32>
    %10 = vector.broadcast %5 : vector<1x128xf32> to vector<4x128xf32>
    %11 = arith.mulf %10, %9 : vector<4x128xf32>
    %12 = arith.addf %8, %11 : vector<4x128xf32>
    %c0_7 = arith.constant 0 : index
    %c0_8 = arith.constant 0 : index
    %13 = vector.load %arg1[%c0_7, %c0_8] : memref<4x128xf32, #tpu.memory_space<vmem>>, vector<4x128xf32>
    %14 = arith.addf %13, %12 : vector<4x128xf32>
    %c0_9 = arith.constant 0 : index
    %c0_10 = arith.constant 0 : index
    %15 = vector.load %arg6[%c0_9, %c0_10] : memref<4x128xf32, #tpu.memory_space<vmem>>, vector<4x128xf32>
    tpu.vector_store %arg6[%c0_9, %c0_10], %14 {strides = array<i32>} : memref<4x128xf32, #tpu.memory_space<vmem>>, vector<4x128xf32>,
    return
  }
  func.func @transform_0(%arg0: i32) -> (i32, i32) {
    %c0_i32 = arith.constant 0 : i32
    %c0_i32_0 = arith.constant 0 : i32
    return %arg0, %c0_i32 : i32, i32
  }
  func.func @transform_1(%arg0: i32) -> (i32, i32, i32) {
    %c0_i32 = arith.constant 0 : i32
    %c0_i32_0 = arith.constant 0 : i32
    %c0_i32_1 = arith.constant 0 : i32
    %c0_i32_2 = arith.constant 0 : i32
    return %c0_i32, %c0_i32_0, %c0_i32_1 : i32, i32, i32
  }
  func.func @transform_2(%arg0: i32) -> (i32, i32, i32) {
    %c0_i32 = arith.constant 0 : i32
    %c0_i32_0 = arith.constant 0 : i32
    %c0_i32_1 = arith.constant 0 : i32
    %c0_i32_2 = arith.constant 0 : i32
    return %c0_i32, %c0_i32_0, %c0_i32_1 : i32, i32, i32
  }
  func.func @transform_3(%arg0: i32) -> (i32, i32) {
    %c0_i32 = arith.constant 0 : i32
    %c0_i32_0 = arith.constant 0 : i32
    %c0_i32_1 = arith.constant 0 : i32
    return %c0_i32, %c0_i32_0 : i32, i32
  }
  func.func @transform_4(%arg0: i32) -> (i32, i32) {
    %c0_i32 = arith.constant 0 : i32
    %c0_i32_0 = arith.constant 0 : i32
    %c0_i32_1 = arith.constant 0 : i32
    return %c0_i32, %c0_i32_0 : i32, i32
  }
  func.func @transform_5(%arg0: i32) -> (i32, i32) {
    %c0_i32 = arith.constant 0 : i32
    %c0_i32_0 = arith.constant 0 : i32
    return %arg0, %c0_i32 : i32, i32
  }
}

</mosaic_0001>

<llo_original>
// kernel: positional_encoding_forward.1
$region0: #{positional_encoding_forward.1}
  #allocation0 [shape = 'u32[]', space=smem, size = 0x4, offset = 0x4, fixed_abs, tag = 'smem constant byte address 0x4 - core index']
  #allocation1 [shape = 'u32[72,128]{1,0:T(1,128)}', space=vmem, size = 0x9000, scoped, tag = 'internal scratch']
  %s0 = inlined_call_operand.vmem [shape: f32[4,128], index: 0, kind: input, shape index: {}]
  %s1 = inlined_call_operand.vmem [shape: f32[1,1,128], index: 1, kind: input, shape index: {}]
  %s2 = inlined_call_operand.vmem [shape: f32[1,1,128], index: 2, kind: input, shape index: {}]
  %s3 = inlined_call_operand.vmem [shape: f32[4,128], index: 3, kind: input, shape index: {}]
  %s4 = inlined_call_operand.vmem [shape: f32[4,128], index: 4, kind: input, shape index: {}]
  %s5 = inlined_call_operand.vmem [shape: f32[4,128], index: 5, kind: output, shape index: {}]
  %s6 = sld [smem:[#allocation0]]
  $region30: #{positional_encoding_forward.1} parent=0
    _
  %s8 = ssub.s32 1, %s6
  %s9 = scalar_select 0, %s8, %s6
  // Predicated region
  $region2: #{positional_encoding_forward.1} parent=0 // pred_check
    _
  $region3: #{positional_encoding_forward.1} parent=0 // pred_check_branch
    %11 = sbr.rel (0) target = $region5
  $region4: #{positional_encoding_forward.1} parent=0 // pred_region
    _
  $region5: #{positional_encoding_forward.1} parent=0 // pred_fallthru
    _
  // Predicated region
  $region6: #{positional_encoding_forward.1} parent=0 // pred_check
    _
  $region7: #{positional_encoding_forward.1} parent=0 // pred_check_branch
    %13 = sbr.rel (0) target = $region9
  $region8: #{positional_encoding_forward.1} parent=0 // pred_region
    _
  $region9: #{positional_encoding_forward.1} parent=0 // pred_fallthru
    _
  // Predicated region
  $region10: #{positional_encoding_forward.1} parent=0 // pred_check
    _
  $region11: #{positional_encoding_forward.1} parent=0 // pred_check_branch
    %15 = sbr.rel (0) target = $region13
  $region12: #{positional_encoding_forward.1} parent=0 // pred_region
    _
  $region13: #{positional_encoding_forward.1} parent=0 // pred_fallthru
    _
  // Predicated region
  $region14: #{positional_encoding_forward.1} parent=0 // pred_check
    _
  $region15: #{positional_encoding_forward.1} parent=0 // pred_check_branch
    %17 = sbr.rel (0) target = $region17
  $region16: #{positional_encoding_forward.1} parent=0 // pred_region
    _
  $region17: #{positional_encoding_forward.1} parent=0 // pred_fallthru
    _
  // Predicated region
  $region18: #{positional_encoding_forward.1} parent=0 // pred_check
    _
  $region19: #{positional_encoding_forward.1} parent=0 // pred_check_branch
    %19 = sbr.rel (0) target = $region21
  $region20: #{positional_encoding_forward.1} parent=0 // pred_region
    _
  $region21: #{positional_encoding_forward.1} parent=0 // pred_fallthru
    _
  %v20 = vld [vmem:[%s1] sm:$0x1]
  %v21 = vld [vmem:[%s2] sm:$0x1]
  %v22 = vld [vmem:[%s3] sm:$0xf]
  %v24 = vperm.slane %v20, 0
  %v26 = vmul.f32 %v24, %v22
  %v27 = vld [vmem:[%s4] sm:$0xf]
  %v29 = vperm.slane %v21, 0
  %v31 = vmul.f32 %v29, %v27
  %v32 = vadd.f32 %v26, %v31
  %v33 = vld [vmem:[%s0] sm:$0xf]
  %v34 = vadd.f32 %v33, %v32
  %35 = vst [vmem:[%s5] sm:$0xf] %v34
  // Predicated region
  $region22: #{positional_encoding_forward.1} parent=0 // pred_check
    _
  $region23: #{positional_encoding_forward.1} parent=0 // pred_check_branch
    %37 = sbr.rel (0) target = $region25
  $region24: #{positional_encoding_forward.1} parent=0 // pred_region
    _
  $region25: #{positional_encoding_forward.1} parent=0 // pred_fallthru
    _
  // Predicated region
  $region26: #{positional_encoding_forward.1} parent=0 // pred_check
    _
  $region27: #{positional_encoding_forward.1} parent=0 // pred_check_branch
    %39 = sbr.rel (0) target = $region29
  $region28: #{positional_encoding_forward.1} parent=0 // pred_region
    _
  $region29: #{positional_encoding_forward.1} parent=0 // pred_fallthru
    _

</llo_original>
